<compile_context>
chip_gen: v5e
topology: v5e:2x2
jax: 0.10.0
libtpu: 0.0.40
codegen_flags: <defaults>
</compile_context>

<pallas_src>
import functools

import jax
import jax.numpy as jnp
from jax import lax
from jax.experimental import pallas as pl
from jax.experimental.pallas import tpu as pltpu


def _round_up(x, m):
    return ((x + m - 1) // m) * m


# ---------------------------------------------------------------------------
# Kernel 1: CLIP pairwise contrastive per-sample losses
# ---------------------------------------------------------------------------
def _clip_loss_kernel(img_ref, txt_ref, scale_ref, loss_ref):
    # img_ref: [B, D], txt_ref: [B, D] (native dtype), scale_ref: [1] f32 (SMEM)
    # loss_ref: [1, B] f32  (loss_image_text[i] = CE_row(i) + CE_col(i))
    scale = scale_ref[0]
    img = img_ref[...]
    txt = txt_ref[...]
    imgf = img.astype(jnp.float32)
    txtf = txt.astype(jnp.float32)

    # Fold logit_scale into one operand before the matmul (B*D multiply instead
    # of B*B) and feed native-dtype operands to the MXU (bf16 runs at full rate,
    # f32 accumulation via preferred_element_type).
    img_scaled = (imgf * scale).astype(img.dtype)
    logits = lax.dot_general(
        img_scaled, txt, (((1,), (1,)), ((), ())),
        preferred_element_type=jnp.float32,
    )  # [B, B] == scale * img @ txt.T

    # Diagonal (target logit for both CE directions) straight from the features:
    # O(B*D) elementwise + lane reduce, no [B,B] iota/eye temporaries.
    diag = scale * jnp.sum(imgf * txtf, axis=-1)  # [B]

    # Numerically-stable log-sum-exp over rows (image->text CE) and columns
    # (text->image CE).  Per-row / per-col max is kept (a single global max
    # would risk log(0) for rows far below the global max at large scales).
    row_max = jnp.max(logits, axis=1)
    lse_row = jnp.log(jnp.sum(jnp.exp(logits - row_max[:, None]), axis=1)) + row_max
    col_max = jnp.max(logits, axis=0)
    lse_col = jnp.log(jnp.sum(jnp.exp(logits - col_max[None, :]), axis=0)) + col_max

    # (lse_row - diag) + (lse_col - diag)
    loss_ref[...] = (lse_row + lse_col - 2.0 * diag)[None, :]


def clip_per_sample_loss(image_features, text_features, logit_scale):
    # TODO(synk): for very large gathered batches (B >~ 2K on v7x, ~4K on
    # v5e/v6e) the single-shot [B,B] logits no longer fits VMEM; switch to a
    # column-tiled grid with online (flash-style) row LSE + exact per-column LSE.
    B = image_features.shape[0]
    scale_arr = jnp.asarray(logit_scale, jnp.float32).reshape((1,))
    out = pl.pallas_call(
        _clip_loss_kernel,
        out_shape=jax.ShapeDtypeStruct((1, B), jnp.float32),
        in_specs=[
            pl.BlockSpec(memory_space=pltpu.MemorySpace.VMEM),
            pl.BlockSpec(memory_space=pltpu.MemorySpace.VMEM),
            pl.BlockSpec(memory_space=pltpu.MemorySpace.SMEM),
        ],
        out_specs=pl.BlockSpec(memory_space=pltpu.MemorySpace.VMEM),
    )(image_features, text_features, scale_arr)
    return out[0]  # [B]


# ---------------------------------------------------------------------------
# Kernel 2: caption (token-level) cross-entropy with ignore_index, row-tiled
# ---------------------------------------------------------------------------
# Tile target: the tile is cast to f32 in-kernel and the LSE math produces
# block-shaped temporaries, so leave VMEM headroom (fits within the 48 MiB
# limit on all generations, including v7x's 64 MiB physical VMEM).
_TARGET_TILE_BYTES = 4 * 1024 * 1024
_CAPTION_VMEM_LIMIT = 48 * 1024 * 1024


def _caption_loss_kernel(logits_ref, labels_ref, sum_ref, cnt_ref, *,
                         pad_id, n_rows, tile_n):
    # logits_ref: [tile_n, V] native dtype, labels_ref: [tile_n, 1] int32
    # sum_ref / cnt_ref: [1, 8, 128] f32 lane-dense per-tile partials.
    logits = logits_ref[...].astype(jnp.float32)   # per-tile cast; bf16 stays bf16 over HBM/DMA
    labels = labels_ref[...]                       # [tile_n, 1]
    tn, V = logits.shape

    m = jnp.max(logits, axis=1, keepdims=True)                               # [tn,1]
    lse = jnp.log(jnp.sum(jnp.exp(logits - m), axis=1, keepdims=True)) + m   # [tn,1]

    # Target logit via select+lane-sum (no float one-hot temporary / MXU use).
    vocab_ids = lax.broadcasted_iota(jnp.int32, (tn, V), 1)
    tgt = jnp.sum(jnp.where(vocab_ids == labels, logits, 0.0),
                  axis=1, keepdims=True)                                     # [tn,1]
    tok_loss = lse - tgt                                                     # [tn,1]

    valid = labels != pad_id
    if n_rows % tile_n != 0:
        # Static check: only the last grid step holds a partial block; mask
        # rows past the real end (they contain DMA padding garbage).
        row_ids = pl.program_id(0) * tile_n + lax.broadcasted_iota(jnp.int32, (tn, 1), 0)
        in_range = row_ids < n_rows
        valid = jnp.logical_and(valid, in_range)
        tok_loss = jnp.where(in_range, tok_loss, 0.0)

    validf = valid.astype(jnp.float32)
    psum = jnp.sum(tok_loss * validf)
    pcnt = jnp.sum(validf)

    # Lane-dense (8,128) output blocks -> unmasked vector stores.
    sum_ref[...] = jnp.full(sum_ref.shape, psum, jnp.float32)
    cnt_ref[...] = jnp.full(cnt_ref.shape, pcnt, jnp.float32)


def caption_loss_mean(logits, labels, pad_id, *, tile_n=None):
    # logits: [B, T, V] (native dtype, e.g. bf16), labels: [B, T] int
    B, T, V = logits.shape
    N = B * T
    logits2d = logits.reshape(N, V)                   # no dtype cast: keep HBM traffic minimal
    labels2d = labels.reshape(N, 1).astype(jnp.int32)

    if tile_n is None:
        bytes_per_row = V * jnp.dtype(logits.dtype).itemsize
        tile_n = max(8, _TARGET_TILE_BYTES // bytes_per_row)
        tile_n = (tile_n // 8) * 8
        tile_n = min(tile_n, _round_up(N, 8))
    n_tiles = pl.cdiv(N, tile_n)

    kernel = functools.partial(_caption_loss_kernel,
                               pad_id=pad_id, n_rows=N, tile_n=tile_n)
    sums, cnts = pl.pallas_call(
        kernel,
        grid=(n_tiles,),
        out_shape=(
            jax.ShapeDtypeStruct((n_tiles, 8, 128), jnp.float32),
            jax.ShapeDtypeStruct((n_tiles, 8, 128), jnp.float32),
        ),
        in_specs=[
            pl.BlockSpec((tile_n, V), lambda i: (i, 0)),
            pl.BlockSpec((tile_n, 1), lambda i: (i, 0)),
        ],
        out_specs=(
            pl.BlockSpec((1, 8, 128), lambda i: (i, 0, 0)),
            pl.BlockSpec((1, 8, 128), lambda i: (i, 0, 0)),
        ),
        compiler_params=pltpu.CompilerParams(
            dimension_semantics=("parallel",),       # shard row tiles across cores (v7x megacore)
            vmem_limit_bytes=_CAPTION_VMEM_LIMIT,
        ),
    )(logits2d, labels2d)

    loss_sum = jnp.sum(sums[:, 0, 0])
    valid_cnt = jnp.sum(cnts[:, 0, 0])
    # Note: if every label == pad_id this divides by zero (NaN), matching torch.
    return loss_sum / valid_cnt


# ---------------------------------------------------------------------------
# CoCaLoss forward (world_size == 1 path)
# ---------------------------------------------------------------------------
def coca_loss_forward(
    image_features,
    text_features,
    logits,
    labels,
    logit_scale,
    *,
    caption_loss_weight,
    clip_loss_weight,
    pad_id=0,
    caption_tile_n=None,
):
    # ---- ClipLoss.forward ----
    per_sample = clip_per_sample_loss(image_features, text_features, logit_scale)  # [B]
    B = per_sample.shape[0]
    # truncated_loss = True: keep smallest 95% of per-sample losses
    sorted_loss = jnp.sort(per_sample)
    upper = int(B * 0.95)
    clip_loss = jnp.mean(sorted_loss[:upper]) / 2.0
    clip_loss = clip_loss_weight * clip_loss

    # ---- caption loss (CrossEntropyLoss with ignore_index=pad_id) ----
    cap_loss = caption_loss_mean(logits, labels, pad_id, tile_n=caption_tile_n)
    cap_loss = caption_loss_weight * cap_loss

    return clip_loss, cap_loss


# ---------------------------------------------------------------------------
# Pure-JAX reference (mirrors the PyTorch semantics) for a correctness check
# ---------------------------------------------------------------------------
def _reference(image_features, text_features, logits, labels, logit_scale,
               caption_loss_weight, clip_loss_weight, pad_id):
    L = logit_scale * image_features.astype(jnp.float32) @ text_features.astype(jnp.float32).T
    li = -jnp.diagonal(jax.nn.log_softmax(L, axis=1))
    lt = -jnp.diagonal(jax.nn.log_softmax(L.T, axis=1))
    loss = li + lt
    s = jnp.sort(loss)
    upper = int(loss.shape[0] * 0.95)
    clip = clip_loss_weight * (jnp.mean(s[:upper]) / 2.0)

    logp = jax.nn.log_softmax(logits.astype(jnp.float32), axis=-1)
    tgt = jnp.take_along_axis(logp, labels[..., None], axis=-1)[..., 0]
    valid = (labels != pad_id).astype(jnp.float32)
    cap = caption_loss_weight * (-(jnp.sum(tgt * valid) / jnp.sum(valid)))
    return clip, cap


if __name__ == "__main__":
    # Small deterministic example: B=8, D=32, T=8, V=128
    B, D, T, V = 8, 32, 8, 128
    pad_id = 0
    caption_loss_weight = 2.0
    clip_loss_weight = 1.0

    key = jax.random.PRNGKey(0)
    k1, k2, k3, k4 = jax.random.split(key, 4)

    image_features = jax.random.normal(k1, (B, D), jnp.float32)
    text_features = jax.random.normal(k2, (B, D), jnp.float32)
    image_features = image_features / jnp.linalg.norm(image_features, axis=-1, keepdims=True)
    text_features = text_features / jnp.linalg.norm(text_features, axis=-1, keepdims=True)

    logits = jax.random.normal(k3, (B, T, V), jnp.float32)
    labels = jax.random.randint(k4, (B, T), 0, V, dtype=jnp.int32)
    labels = labels.at[:, -2:].set(pad_id)   # exercise ignore_index path

    logit_scale = jnp.float32(10.0)

    ref_clip, ref_cap = _reference(
        image_features, text_features, logits, labels, logit_scale,
        caption_loss_weight, clip_loss_weight, pad_id,
    )

    # 1) default (auto-chosen) caption tile size
    clip_l, cap_l = coca_loss_forward(
        image_features, text_features, logits, labels, logit_scale,
        caption_loss_weight=caption_loss_weight,
        clip_loss_weight=clip_loss_weight,
        pad_id=pad_id,
    )
    clip_l = jax.block_until_ready(clip_l)
    cap_l = jax.block_until_ready(cap_l)
    assert jnp.allclose(clip_l, ref_clip, atol=1e-4, rtol=1e-4), (clip_l, ref_clip)
    assert jnp.allclose(cap_l, ref_cap, atol=1e-4, rtol=1e-4), (cap_l, ref_cap)

    # 2) force a multi-step grid with a partial last tile (exercise masking path)
    clip_l2, cap_l2 = coca_loss_forward(
        image_features, text_features, logits, labels, logit_scale,
        caption_loss_weight=caption_loss_weight,
        clip_loss_weight=clip_loss_weight,
        pad_id=pad_id,
        caption_tile_n=24,   # 3 tiles over N=64 rows -> last tile partial
    )
    cap_l2 = jax.block_until_ready(cap_l2)
    assert jnp.allclose(cap_l2, ref_cap, atol=1e-4, rtol=1e-4), (cap_l2, ref_cap)

    print("KERNEL_OK")
</pallas_src>

<mosaic_0001>
module attributes {stable_mosaic.version = 11 : i64} {
  func.func @_clip_loss_kernel(%arg0: memref<8x32xf32, #tpu.memory_space<vmem>>, %arg1: memref<8x32xf32, #tpu.memory_space<vmem>>, %arg2: memref<1xf32, #tpu.memory_space<smem>>, %arg3: memref<1x8xf32, #tpu.memory_space<vmem>>) attributes {dimension_semantics = [], scalar_prefetch = 0 : i64, scratch_operands = 0 : i64, tpu.core_type = #tpu.core_type<tc>} {
    %c0 = arith.constant 0 : index
    %0 = memref.load %arg2[%c0] : memref<1xf32, #tpu.memory_space<smem>>
    %c0_0 = arith.constant 0 : index
    %c0_1 = arith.constant 0 : index
    %1 = vector.load %arg0[%c0_0, %c0_1] : memref<8x32xf32, #tpu.memory_space<vmem>>, vector<8x32xf32>
    %c0_2 = arith.constant 0 : index
    %c0_3 = arith.constant 0 : index
    %2 = vector.load %arg1[%c0_2, %c0_3] : memref<8x32xf32, #tpu.memory_space<vmem>>, vector<8x32xf32>
    %3 = vector.broadcast %0 : f32 to vector<8x32xf32>
    %4 = arith.mulf %1, %3 : vector<8x32xf32>
    %cst = arith.constant dense<0.000000e+00> : vector<8x8xf32>
    %5 = tpu.matmul %4, %2, %cst {dimension_numbers = #tpu.dot_dimension_numbers<[1], [1], [0], [0], [0, 0, 1, 0], [], []>} : vector<8x32xf32>, vector<8x32xf32>, vector<8x8xf32> -> vector<8x8xf32>
    %6 = arith.mulf %1, %2 : vector<8x32xf32>
    %cst_4 = arith.constant dense<0.000000e+00> : vector<8xf32>
    %7 = vector.multi_reduction <add>, %6, %cst_4 [1] : vector<8x32xf32> to vector<8xf32>
    %8 = vector.broadcast %0 : f32 to vector<8xf32>
    %9 = arith.mulf %8, %7 : vector<8xf32>
    %cst_5 = arith.constant dense<0xFF800000> : vector<8xf32>
    %10 = vector.multi_reduction <maximumf>, %5, %cst_5 [1] : vector<8x8xf32> to vector<8xf32>
    %11 = vector.shape_cast %10 : vector<8xf32> to vector<8x1xf32>
    %12 = vector.broadcast %11 : vector<8x1xf32> to vector<8x8xf32>
    %13 = arith.subf %5, %12 : vector<8x8xf32>
    %14 = math.exp %13 : vector<8x8xf32>
    %cst_6 = arith.constant dense<0.000000e+00> : vector<8xf32>
    %15 = vector.multi_reduction <add>, %14, %cst_6 [1] : vector<8x8xf32> to vector<8xf32>
    %16 = math.log %15 : vector<8xf32>
    %17 = arith.addf %16, %10 : vector<8xf32>
    %cst_7 = arith.constant dense<0xFF800000> : vector<8xf32>
    %18 = vector.multi_reduction <maximumf>, %5, %cst_7 [0] : vector<8x8xf32> to vector<8xf32>
    %19 = vector.shape_cast %18 : vector<8xf32> to vector<1x8xf32>
    %20 = vector.broadcast %19 : vector<1x8xf32> to vector<8x8xf32>
    %21 = arith.subf %5, %20 : vector<8x8xf32>
    %22 = math.exp %21 : vector<8x8xf32>
    %cst_8 = arith.constant dense<0.000000e+00> : vector<8xf32>
    %23 = vector.multi_reduction <add>, %22, %cst_8 [0] : vector<8x8xf32> to vector<8xf32>
    %24 = math.log %23 : vector<8xf32>
    %25 = arith.addf %24, %18 : vector<8xf32>
    %26 = arith.addf %17, %25 : vector<8xf32>
    %cst_9 = arith.constant 2.000000e+00 : f32
    %27 = vector.broadcast %cst_9 : f32 to vector<8xf32>
    %28 = arith.mulf %27, %9 : vector<8xf32>
    %29 = arith.subf %26, %28 : vector<8xf32>
    %30 = vector.shape_cast %29 : vector<8xf32> to vector<1x8xf32>
    %c0_10 = arith.constant 0 : index
    %c0_11 = arith.constant 0 : index
    %31 = vector.load %arg3[%c0_10, %c0_11] : memref<1x8xf32, #tpu.memory_space<vmem>>, vector<1x8xf32>
    tpu.vector_store %arg3[%c0_10, %c0_11], %30 {strides = array<i32>} : memref<1x8xf32, #tpu.memory_space<vmem>>, vector<1x8xf32>,
    return
  }
}

</mosaic_0001>

<llo_original>
// kernel: tpu_custom_call.1
$region0: #{tpu_custom_call.1}
  #allocation0 [shape = 'u32[]', space=smem, size = 0x4, offset = 0x4, fixed_abs, tag = 'smem constant byte address 0x4 - core index']
  #allocation1 [shape = 'u32[72,128]{1,0:T(1,128)}', space=vmem, size = 0x9000, scoped, tag = 'internal scratch']
  #allocation2 [shape = 'f32[1]{0:T(128)S(6)}', space=smem, size = 0x200, scoped, tag = 'scoped memory for tpu_custom_call.1']
  %s0 = inlined_call_operand.hbm [shape: f32[8,32], index: 0, kind: input, shape index: {}]
  %s1 = inlined_call_operand.hbm [shape: f32[8,32], index: 1, kind: input, shape index: {}]
  %s2 = inlined_call_operand.<no memory space> [shape: f32[1], index: 2, kind: input, shape index: {}]
  %s3 = inlined_call_operand.hbm [shape: f32[1,8], index: 3, kind: output, shape index: {}]
  %s4 = sld [smem:[#allocation0]]
  $region30: #{tpu_custom_call.1} parent=0
    _
  %s6 = ssub.s32 1, %s4
  %s7 = scalar_select 0, %s6, %s4
  %8 = sst [smem:[#allocation2]] %s2
  $region1: #{tpu_custom_call.1} parent=0
    #allocation3 [shape = 'u8[4096]{0}', space=vmem, size = 0x1000, scoped, tag = 'input window, operand 0, single buffered']
    #allocation4 [shape = 's32[1]{0}', space=sflag, size = 0x4, scoped, tag = 'scoped memory for tpu_custom_call.1']
    #allocation5 [shape = 's32[1]{0}', space=sflag, size = 0x4, scoped, tag = 'scoped memory for tpu_custom_call.1']
    #allocation6 [shape = 'u8[4096]{0}', space=vmem, size = 0x1000, scoped, tag = 'input window, operand 1, single buffered']
    #allocation7 [shape = 's32[1]{0}', space=sflag, size = 0x4, scoped, tag = 'scoped memory for tpu_custom_call.1']
    #allocation8 [shape = 'u8[512]{0}', space=vmem, size = 0x400, scoped, tag = 'output window, operand 0, single buffered']
    %9 = vsyncpa [#allocation4], 0
    %10 = vsyncpa [#allocation7], 0
    %11 = vsyncpa [#allocation5], 0
    // Predicated region
    $region2: #{tpu_custom_call.1} parent=1 // pred_check
      _
    $region3: #{tpu_custom_call.1} parent=1 // pred_check_branch
      %13 = sbr.rel (0) target = $region5
    $region4: #{tpu_custom_call.1} parent=1 // pred_region
      %15 = vsyncadd [#allocation4], 0
      %s17 = sshll.u32 %s0, 4
      %s18 = int_to_ptr.hbm [resolvable:$true] %s17
      %s19 = sshll.u32 [#allocation3], 4
      %s20 = int_to_ptr.vmem [resolvable:$true] %s19
      %22 = dma.hbm_to_vmem [thread:$0]  %s18, 128, %s20, [#allocation4]
    $region5: #{tpu_custom_call.1} parent=1 // pred_fallthru
      _
    // Predicated region
    $region6: #{tpu_custom_call.1} parent=1 // pred_check
      _
    $region7: #{tpu_custom_call.1} parent=1 // pred_check_branch
      %24 = sbr.rel (0) target = $region9
    $region8: #{tpu_custom_call.1} parent=1 // pred_region
      %26 = vsyncadd [#allocation7], 0
      %s28 = sshll.u32 %s1, 4
      %s29 = int_to_ptr.hbm [resolvable:$true] %s28
      %s30 = sshll.u32 [#allocation6], 4
      %s31 = int_to_ptr.vmem [resolvable:$true] %s30
      %33 = dma.hbm_to_vmem [thread:$0]  %s29, 128, %s31, [#allocation7]
    $region9: #{tpu_custom_call.1} parent=1 // pred_fallthru
      _
    // Predicated region
    $region10: #{tpu_custom_call.1} parent=1 // pred_check
      _
    $region11: #{tpu_custom_call.1} parent=1 // pred_check_branch
      %35 = sbr.rel (0) target = $region13
    $region12: #{tpu_custom_call.1} parent=1 // pred_region
      _
    $region13: #{tpu_custom_call.1} parent=1 // pred_fallthru
      _
    // Predicated region
    $region14: #{tpu_custom_call.1} parent=1 // pred_check
      _
    $region15: #{tpu_custom_call.1} parent=1 // pred_check_branch
      %37 = sbr.rel (0) target = $region17
    $region16: #{tpu_custom_call.1} parent=1 // pred_region
      %39 = dma.done [#allocation4], 128
    $region17: #{tpu_custom_call.1} parent=1 // pred_fallthru
      _
    // Predicated region
    $region18: #{tpu_custom_call.1} parent=1 // pred_check
      _
    $region19: #{tpu_custom_call.1} parent=1 // pred_check_branch
      %41 = sbr.rel (0) target = $region21
    $region20: #{tpu_custom_call.1} parent=1 // pred_region
      %43 = dma.done [#allocation7], 128
    $region21: #{tpu_custom_call.1} parent=1 // pred_fallthru
      _
    %s44 = sld [smem:[#allocation2]]
    %v45 = vld [vmem:[#allocation3] sm:$0xff]
    %v46 = vld [vmem:[#allocation6] sm:$0xff]
    %v47 = vstv %s44
    %v48 = vmul.f32 %v45, %v47
    %vm49 = vcmask 261120
    %v51 = vsel %vm49, %v48, 0
    %v54 = vsel %vm49, %v46, 0
    %56 = vmatpush.xpose.msra.mxu0 0.0
    %57 = vmatpush.xpose.msra.mxu0 0.0
    %58 = vmatpush.xpose.msra.mxu0 0.0
    %59 = vmatpush.xpose.msra.mxu0 0.0
    %60 = vmatpush.xpose.msra.mxu0 0.0
    %61 = vmatpush.xpose.msra.mxu0 0.0
    %62 = vmatpush.xpose.msra.mxu0 0.0
    %63 = vmatpush.xpose.msra.mxu0 0.0
    %64 = vmatpush.xpose.msra.mxu0 0.0
    %65 = vmatpush.xpose.msra.mxu0 0.0
    %66 = vmatpush.xpose.msra.mxu0 0.0
    %67 = vmatpush.xpose.msra.mxu0 0.0
    %68 = vmatpush.xpose.msra.mxu0 0.0
    %69 = vmatpush.xpose.msra.mxu0 0.0
    %70 = vmatpush.xpose.msra.mxu0 0.0
    %71 = vmatpush.xpose.msra.mxu0 %v54
    %72 = vmatmul.f32.gmra.mxu0 %v51
    %v73 = vpop.f32.mrf.mxu0
    %v74 = vadd.f32 0.0, %v73
    %75 = vdwg.mxu0
    %v76 = vmul.f32 %v45, %v46
    %v77 = vsel %vm49, %v76, 0.0
    %78 = vadd.xlane.f32.xlu0 %v77
    %v79 = vpop.xlane.xlu0 %78
    %v80 = vmul.f32 %v47, %v79
    %vm81 = vcmask 64512
    %v82 = vsel %vm81, %v74, -inf
    %83 = vmax.xlane.f32.xlu0 %v82
    %v84 = vpop.xlane.xlu0 %83
    %v85 = vsub.f32 %v74, %v84
    %v86 = vmul.f32 %v85, 1.442695
    %v87 = vpow.pop %v86
    %v88 = vsel %vm81, %v87, 0.0
    %89 = vadd.xlane.f32.xlu0 %v88
    %v90 = vpop.xlane.xlu0 %89
    %v91 = vlog2.pop %v90
    %v92 = vmul.f32 %v91, 0.6931472
    %v93 = vadd.f32 %v92, %v84
    %v94 = vrot.slane %v82, 4
    %v95 = vmax.f32 %v82, %v94
    %v96 = vrot.slane %v95, 2
    %v97 = vmax.f32 %v95, %v96
    %v98 = vrot.slane %v97, 1
    %v99 = vmax.f32 %v97, %v98
    %v100 = vsub.f32 %v74, %v99
    %v101 = vmul.f32 %v100, 1.442695
    %v102 = vpow.pop %v101
    %v103 = vsel %vm81, %v102, 0.0
    %v104 = vrot.slane %v103, 4
    %v105 = vadd.f32 %v103, %v104
    %v106 = vrot.slane %v105, 2
    %v107 = vadd.f32 %v105, %v106
    %v108 = vrot.slane %v107, 1
    %v109 = vadd.f32 %v107, %v108
    %v110 = vlog2.pop %v109
    %v111 = vmul.f32 %v110, 0.6931472
    %v112 = vadd.f32 %v111, %v99
    %v114 = vlaneseq
    %v115 = vshrl.u32 %v114, 7
    %117 = vset.pattern.permute.xlu0 %v115
    %118 = vperm.xlu0 %117, %v112
    %v119 = vpop.permute.xlu0 %118
    %v121 = vadd.f32 %v93, %v119
    %v122 = vmul.f32 %v80, 2.0
    %v123 = vsub.f32 %v121, %v122
    %125 = vset.pattern.permute.xlu0 0
    %126 = vperm.xlu0 %125, %v123
    %v127 = vpop.permute.xlu0 %126
    %v128 = vlaneseq
    %v129 = vand.u32 %v128, 127
    %v130 = vperm.slane %v127, %v129
    %vm132 = vcmask 57344
    %133 = vst.msk [vmem:[#allocation8] sm:$0x1] %vm132, %v130
    // Predicated region
    $region22: #{tpu_custom_call.1} parent=1 // pred_check
      _
    $region23: #{tpu_custom_call.1} parent=1 // pred_check_branch
      %135 = sbr.rel (0) target = $region25
    $region24: #{tpu_custom_call.1} parent=1 // pred_region
      %137 = vsyncadd [#allocation5], 0
      %s139 = sshll.u32 [#allocation8], 4
      %s140 = int_to_ptr.vmem [resolvable:$true] %s139
      %s141 = sshll.u32 %s3, 4
      %s142 = int_to_ptr.hbm [resolvable:$true] %s141
      %144 = dma.vmem_to_hbm [thread:$0]  %s140, 16, %s142, [#allocation5]
    $region25: #{tpu_custom_call.1} parent=1 // pred_fallthru
      _
    // Predicated region
    $region26: #{tpu_custom_call.1} parent=1 // pred_check
      _
    $region27: #{tpu_custom_call.1} parent=1 // pred_check_branch
      %146 = sbr.rel (0) target = $region29
    $region28: #{tpu_custom_call.1} parent=1 // pred_region
      %148 = dma.done [#allocation5], 16
    $region29: #{tpu_custom_call.1} parent=1 // pred_fallthru
      _
    %149 = vsyncpa [#allocation4], 1
    %150 = vsyncpa [#allocation7], 1
    %151 = vsyncpa [#allocation5], 1

</llo_original>
